<compile_context>
chip_gen: v7x
topology: tpu7x:2x2x1
jax: 0.10.0
libtpu: 0.0.40
codegen_flags: <defaults>
</compile_context>

<pallas_src>
import functools

import jax
import jax.numpy as jnp
from jax.experimental import pallas as pl
from jax.experimental.pallas import tpu as pltpu


def _round_up(x: int, m: int) -> int:
    return ((x + m - 1) // m) * m


def linmodel_kernel(x_ref, wet_ref, be_ref, wlt_ref, bl_ref, o_ref, acc_ref):
    """One (batch-tile, K-chunk) grid point of the fused forward.

    x_ref  : [tm, tk]       f32   flattened-input tile (cast to bf16 in-kernel)
    wet_ref: [tk, F_pad]    bf16  encoder weight chunk, pre-transposed (in, out)
    be_ref : [1, F_pad]     f32   encoder bias (padded)
    wlt_ref: [F_pad, N_pad] f32   classifier weight, pre-transposed (in, out)
    bl_ref : [1, N_pad]     f32   classifier bias (padded)
    o_ref  : [tm, N_pad]    f32   logits tile (lane-dense, padded classes)
    acc_ref: [tm, F_pad]    f32   encoder accumulator (scratch, K-resident)
    """
    k = pl.program_id(1)

    @pl.when(k == 0)
    def _():
        acc_ref[...] = jnp.zeros_like(acc_ref)

    # Encoder partial matmul: bf16 MXU feeds, f32 accumulation.
    acc_ref[...] += jnp.dot(
        x_ref[...].astype(jnp.bfloat16),
        wet_ref[...],
        preferred_element_type=jnp.float32,
    )

    # Finalize once per batch tile: bias, tiny f32 classifier matmul, bias.
    @pl.when(k == pl.num_programs(1) - 1)
    def _():
        feats = acc_ref[...] + be_ref[...]
        logits = jnp.dot(feats, wlt_ref[...], preferred_element_type=jnp.float32)
        o_ref[...] = logits + bl_ref[...]


def prepare_params(we, be, wl, bl):
    """One-time weight prep (transpose + pad + cast), hoisted out of the
    per-call path so the forward never re-pays this HBM pass.

    we: [feature_dim, d_in]  (torch nn.Linear layout: out, in)
    be: [feature_dim]
    wl: [n_classes, feature_dim]
    bl: [n_classes]
    """
    feature_dim, d_in = we.shape
    n_classes = wl.shape[0]
    F_pad = _round_up(feature_dim, 128)
    N_pad = _round_up(n_classes, 128)
    d_pad = _round_up(d_in, 128)

    we_t = (
        jnp.zeros((d_pad, F_pad), jnp.bfloat16)
        .at[:d_in, :feature_dim]
        .set(we.T.astype(jnp.bfloat16))
    )
    be_p = jnp.zeros((1, F_pad), jnp.float32).at[0, :feature_dim].set(be)
    # Classifier weight kept in f32: it is tiny and keeps numerics tight.
    wl_t = (
        jnp.zeros((F_pad, N_pad), jnp.float32)
        .at[:feature_dim, :n_classes]
        .set(wl.T.astype(jnp.float32))
    )
    bl_p = jnp.zeros((1, N_pad), jnp.float32).at[0, :n_classes].set(bl)
    return we_t, be_p, wl_t, bl_p


def _batch_tiling(B):
    """Pick (B_pad, tm).  tm is a multiple of 16 unless the whole batch fits
    in one tile, in which case tm == B_pad == B (a block equal to the full
    array dim satisfies the layout constraint with no padded copy)."""
    if B <= 16:
        return B, B
    B_pad = _round_up(B, 16)
    tm = min(512, B_pad)
    # v7x megacore: ensure >= 2 batch tiles so both TensorCores get work
    # (neutral on single-TC v5e/v6e).
    if B_pad // tm < 2:
        tm = _round_up(B_pad // 2, 16)
    B_pad = _round_up(B_pad, tm)
    return B_pad, tm


def _k_tiling(d_in):
    """Pick (d_pad, tk) with tk a multiple of 128 that exactly divides d_pad,
    as large as possible up to 2048 (fewer K steps -> fewer accumulator RMWs
    and fewer per-step overheads)."""
    d_pad = _round_up(d_in, 128)
    tk = min(2048, d_pad)
    while d_pad % tk != 0:
        tk -= 128
    return d_pad, tk


def linmodel_forward(x_nchw, we_t, be_p, wl_t, bl_p, *, n_classes):
    """x_nchw: [B, C, H, W] f32.  Returns logits [B, n_classes] f32."""
    B = x_nchw.shape[0]
    d_in = x_nchw.shape[1] * x_nchw.shape[2] * x_nchw.shape[3]
    F_pad = we_t.shape[1]
    N_pad = wl_t.shape[1]

    B_pad, tm = _batch_tiling(B)
    d_pad, tk = _k_tiling(d_in)

    # Free reshape (contiguous NCHW -> [B, d_in]), stays f32; padded copy only
    # in the ragged fallback.
    x_flat = x_nchw.reshape(B, d_in)
    if (B_pad, d_pad) != (B, d_in):
        x_in = jnp.zeros((B_pad, d_pad), x_flat.dtype).at[:B, :d_in].set(x_flat)
    else:
        x_in = x_flat

    grid = (B_pad // tm, d_pad // tk)

    flops = 2 * B_pad * d_pad * F_pad + 2 * B_pad * F_pad * N_pad
    bytes_accessed = (
        x_in.size * 4
        + we_t.size * 2
        + wl_t.size * 4
        + be_p.size * 4
        + bl_p.size * 4
        + B_pad * N_pad * 4
    )

    out_padded = pl.pallas_call(
        linmodel_kernel,
        out_shape=jax.ShapeDtypeStruct((B_pad, N_pad), jnp.float32),
        grid_spec=pltpu.PrefetchScalarGridSpec(
            num_scalar_prefetch=0,
            grid=grid,
            in_specs=[
                pl.BlockSpec((tm, tk), lambda i, k: (i, k)),        # x tile (f32)
                pl.BlockSpec((tk, F_pad), lambda i, k: (k, 0)),     # We^T chunk (bf16)
                pl.BlockSpec((1, F_pad), lambda i, k: (0, 0)),      # be (resident)
                pl.BlockSpec((F_pad, N_pad), lambda i, k: (0, 0)),  # Wl^T (resident)
                pl.BlockSpec((1, N_pad), lambda i, k: (0, 0)),      # bl (resident)
            ],
            out_specs=pl.BlockSpec((tm, N_pad), lambda i, k: (i, 0)),
            scratch_shapes=[pltpu.VMEM((tm, F_pad), jnp.float32)],
        ),
        compiler_params=pltpu.CompilerParams(
            dimension_semantics=("parallel", "arbitrary"),
        ),
        cost_estimate=pl.CostEstimate(
            flops=flops, transcendentals=0, bytes_accessed=bytes_accessed
        ),
    )(x_in, we_t, be_p, wl_t, bl_p)

    # Slice away batch / class padding (lane-dense store inside the kernel).
    return out_padded[:B, :n_classes]


def reference_forward(x_nchw, we, be, wl, bl):
    """Pure-JAX f32 reference with identical semantics."""
    B = x_nchw.shape[0]
    x_flat = x_nchw.reshape(B, -1)
    feats = x_flat @ we.T + be
    return feats @ wl.T + bl


if __name__ == "__main__":
    # Small, module-consistent shapes.
    B, C, H, W = 2, 4, 16, 16          # input image batch (NCHW)
    feature_dim = 32                   # encoder output features
    n_classes = 10                     # classifier classes
    d_in = C * H * W

    key = jax.random.PRNGKey(0)
    kx, kwe, kbe, kwl, kbl = jax.random.split(key, 5)

    x = jax.random.normal(kx, (B, C, H, W), dtype=jnp.float32)

    # Deterministic parameter init (roughly nn.Linear's uniform fan-in scale).
    we = jax.random.uniform(kwe, (feature_dim, d_in), jnp.float32,
                            minval=-1.0, maxval=1.0) / jnp.sqrt(d_in)
    be = jax.random.uniform(kbe, (feature_dim,), jnp.float32,
                            minval=-1.0, maxval=1.0) / jnp.sqrt(d_in)
    wl = jax.random.uniform(kwl, (n_classes, feature_dim), jnp.float32,
                            minval=-1.0, maxval=1.0) / jnp.sqrt(feature_dim)
    bl = jax.random.uniform(kbl, (n_classes,), jnp.float32,
                            minval=-1.0, maxval=1.0) / jnp.sqrt(feature_dim)

    # One-time weight prep (hoisted); the jitted forward only streams it.
    params = jax.block_until_ready(prepare_params(we, be, wl, bl))
    fwd = jax.jit(functools.partial(linmodel_forward, n_classes=n_classes))

    out = jax.block_until_ready(fwd(x, *params))
    ref = reference_forward(x, we, be, wl, bl)

    assert out.shape == (B, n_classes), out.shape
    # bf16 encoder matmul with f32 accumulation + f32 classifier matmul:
    # tolerance loosened vs the pure-f32 reference.
    assert jnp.allclose(out, ref, atol=2e-2, rtol=2e-2), (out, ref)
    print("KERNEL_OK")
</pallas_src>

<mosaic_0001>
module attributes {stable_mosaic.version = 11 : i64} {
  func.func @linmodel_kernel(%arg0: i32, %arg1: i32, %arg2: memref<2x1024xf32, #tpu.memory_space<vmem>>, %arg3: memref<1024x128xbf16, #tpu.memory_space<vmem>>, %arg4: memref<1x128xf32, #tpu.memory_space<vmem>>, %arg5: memref<128x128xf32, #tpu.memory_space<vmem>>, %arg6: memref<1x128xf32, #tpu.memory_space<vmem>>, %arg7: memref<2x128xf32, #tpu.memory_space<vmem>>, %arg8: memref<2x128xf32, #tpu.memory_space<vmem>>) attributes {dimension_semantics = [#tpu.dimension_semantics<parallel>, #tpu.dimension_semantics<arbitrary>], iteration_bounds = array<i64: 1, 1>, scalar_prefetch = 0 : i64, scratch_operands = 1 : i64, tpu.core_type = #tpu.core_type<tc>, window_params = [{transform_indices = @transform_0, window_bounds = array<i64: 2, 1024>}, {transform_indices = @transform_1, window_bounds = array<i64: 1024, 128>}, {pipeline_mode = #tpu.pipeline_mode<synchronous>, transform_indices = @transform_2, window_bounds = array<i64: 1, 128>}, {pipeline_mode = #tpu.pipeline_mode<synchronous>, transform_indices = @transform_3, window_bounds = array<i64: 128, 128>}, {pipeline_mode = #tpu.pipeline_mode<synchronous>, transform_indices = @transform_4, window_bounds = array<i64: 1, 128>}, {transform_indices = @transform_5, window_bounds = array<i64: 2, 128>}]} {
    %c0_i32 = arith.constant 0 : i32
    %0 = arith.cmpi eq, %arg1, %c0_i32 : i32
    %1 = arith.extui %0 : i1 to i32
    %c0_i32_0 = arith.constant 0 : i32
    %2 = arith.cmpi ne, %1, %c0_i32_0 : i32
    scf.if %2 {
      %cst_10 = arith.constant 0.000000e+00 : f32
      %13 = vector.broadcast %cst_10 : f32 to vector<2x128xf32>
      %c0_11 = arith.constant 0 : index
      %c0_12 = arith.constant 0 : index
      %14 = vector.load %arg8[%c0_11, %c0_12] : memref<2x128xf32, #tpu.memory_space<vmem>>, vector<2x128xf32>
      tpu.vector_store %arg8[%c0_11, %c0_12], %13 {strides = array<i32>} : memref<2x128xf32, #tpu.memory_space<vmem>>, vector<2x128xf32>,
    } else {
    }
    %c0 = arith.constant 0 : index
    %c0_1 = arith.constant 0 : index
    %3 = vector.load %arg8[%c0, %c0_1] : memref<2x128xf32, #tpu.memory_space<vmem>>, vector<2x128xf32>
    %c0_2 = arith.constant 0 : index
    %c0_3 = arith.constant 0 : index
    %4 = vector.load %arg2[%c0_2, %c0_3] : memref<2x1024xf32, #tpu.memory_space<vmem>>, vector<2x1024xf32>
    %5 = arith.truncf %4 : vector<2x1024xf32> to vector<2x1024xbf16>
    %c0_4 = arith.constant 0 : index
    %c0_5 = arith.constant 0 : index
    %6 = vector.load %arg3[%c0_4, %c0_5] : memref<1024x128xbf16, #tpu.memory_space<vmem>>, vector<1024x128xbf16>
    %cst = arith.constant dense<0.000000e+00> : vector<2x128xf32>
    %7 = tpu.matmul %5, %6, %cst {dimension_numbers = #tpu.dot_dimension_numbers<[1], [0], [0], [1], [0, 0, 1, 1], [], []>} : vector<2x1024xbf16>, vector<1024x128xbf16>, vector<2x128xf32> -> vector<2x128xf32>
    %8 = arith.addf %3, %7 : vector<2x128xf32>
    %c0_6 = arith.constant 0 : index
    %c0_7 = arith.constant 0 : index
    %9 = vector.load %arg8[%c0_6, %c0_7] : memref<2x128xf32, #tpu.memory_space<vmem>>, vector<2x128xf32>
    tpu.vector_store %arg8[%c0_6, %c0_7], %8 {strides = array<i32>} : memref<2x128xf32, #tpu.memory_space<vmem>>, vector<2x128xf32>,
    %c0_i32_8 = arith.constant 0 : i32
    %10 = arith.cmpi eq, %arg1, %c0_i32_8 : i32
    %11 = arith.extui %10 : i1 to i32
    %c0_i32_9 = arith.constant 0 : i32
    %12 = arith.cmpi ne, %11, %c0_i32_9 : i32
    scf.if %12 {
      %c0_10 = arith.constant 0 : index
      %c0_11 = arith.constant 0 : index
      %13 = vector.load %arg8[%c0_10, %c0_11] : memref<2x128xf32, #tpu.memory_space<vmem>>, vector<2x128xf32>
      %c0_12 = arith.constant 0 : index
      %c0_13 = arith.constant 0 : index
      %14 = vector.load %arg4[%c0_12, %c0_13] : memref<1x128xf32, #tpu.memory_space<vmem>>, vector<1x128xf32>
      %15 = vector.broadcast %14 : vector<1x128xf32> to vector<2x128xf32>
      %16 = arith.addf %13, %15 : vector<2x128xf32>
      %c0_14 = arith.constant 0 : index
      %c0_15 = arith.constant 0 : index
      %17 = vector.load %arg5[%c0_14, %c0_15] : memref<128x128xf32, #tpu.memory_space<vmem>>, vector<128x128xf32>
      %cst_16 = arith.constant dense<0.000000e+00> : vector<2x128xf32>
      %18 = tpu.matmul %16, %17, %cst_16 {dimension_numbers = #tpu.dot_dimension_numbers<[1], [0], [0], [1], [0, 0, 1, 1], [], []>} : vector<2x128xf32>, vector<128x128xf32>, vector<2x128xf32> -> vector<2x128xf32>
      %c0_17 = arith.constant 0 : index
      %c0_18 = arith.constant 0 : index
      %19 = vector.load %arg6[%c0_17, %c0_18] : memref<1x128xf32, #tpu.memory_space<vmem>>, vector<1x128xf32>
      %20 = vector.broadcast %19 : vector<1x128xf32> to vector<2x128xf32>
      %21 = arith.addf %18, %20 : vector<2x128xf32>
      %c0_19 = arith.constant 0 : index
      %c0_20 = arith.constant 0 : index
      %22 = vector.load %arg7[%c0_19, %c0_20] : memref<2x128xf32, #tpu.memory_space<vmem>>, vector<2x128xf32>
      tpu.vector_store %arg7[%c0_19, %c0_20], %21 {strides = array<i32>} : memref<2x128xf32, #tpu.memory_space<vmem>>, vector<2x128xf32>,
    } else {
    }
    return
  }
  func.func @transform_0(%arg0: i32, %arg1: i32) -> (i32, i32) {
    %c0_i32 = arith.constant 0 : i32
    return %arg0, %arg1 : i32, i32
  }
  func.func @transform_1(%arg0: i32, %arg1: i32) -> (i32, i32) {
    %c0_i32 = arith.constant 0 : i32
    %c0_i32_0 = arith.constant 0 : i32
    return %arg1, %c0_i32 : i32, i32
  }
  func.func @transform_2(%arg0: i32, %arg1: i32) -> (i32, i32) {
    %c0_i32 = arith.constant 0 : i32
    %c0_i32_0 = arith.constant 0 : i32
    %c0_i32_1 = arith.constant 0 : i32
    return %c0_i32, %c0_i32_0 : i32, i32
  }
  func.func @transform_3(%arg0: i32, %arg1: i32) -> (i32, i32) {
    %c0_i32 = arith.constant 0 : i32
    %c0_i32_0 = arith.constant 0 : i32
    %c0_i32_1 = arith.constant 0 : i32
    return %c0_i32, %c0_i32_0 : i32, i32
  }
  func.func @transform_4(%arg0: i32, %arg1: i32) -> (i32, i32) {
    %c0_i32 = arith.constant 0 : i32
    %c0_i32_0 = arith.constant 0 : i32
    %c0_i32_1 = arith.constant 0 : i32
    return %c0_i32, %c0_i32_0 : i32, i32
  }
  func.func @transform_5(%arg0: i32, %arg1: i32) -> (i32, i32) {
    %c0_i32 = arith.constant 0 : i32
    %c0_i32_0 = arith.constant 0 : i32
    return %arg0, %c0_i32 : i32, i32
  }
}

</mosaic_0001>

<llo_original>
// kernel: linmodel_forward.1
$region0: #{linmodel_forward.1}
  #allocation0 [shape = 'u32[]', space=smem, size = 0x4, offset = 0x4, fixed_abs, tag = 'smem constant byte address 0x4 - core index']
  #allocation1 [shape = 'u32[144,128]{1,0:T(1,128)}', space=vmem, size = 0x12000, scoped, tag = 'internal scratch']
  #allocation2 [shape = 'f32[2,128]{1,0:T(2,128)}', space=vmem, size = 0x400, scoped, tag = 'scratch operand']
  %s0 = inlined_call_operand.vmem [shape: f32[2,1024], index: 0, kind: input, shape index: {}]
  %s1 = inlined_call_operand.hbm [shape: bf16[1024,128], index: 1, kind: input, shape index: {}]
  %s2 = inlined_call_operand.vmem [shape: f32[1,128], index: 2, kind: input, shape index: {}]
  %s3 = inlined_call_operand.vmem [shape: f32[128,128], index: 3, kind: input, shape index: {}]
  %s4 = inlined_call_operand.vmem [shape: f32[1,128], index: 4, kind: input, shape index: {}]
  %s5 = inlined_call_operand.hbm [shape: f32[2,128], index: 5, kind: output, shape index: {}]
  %s6 = sld [smem:[#allocation0]]
  $region42: #{linmodel_forward.1} parent=0
    _
  %s8 = ssub.s32 1, %s6
  %s9 = scalar_select 0, %s8, %s6
  $region1: #{linmodel_forward.1} parent=0
    #allocation3 [shape = 'u8[262144]{0}', space=vmem, size = 0x40000, scoped, tag = 'input window, operand 1, single buffered']
    #allocation4 [shape = 's32[1]{0}', space=sflag, size = 0x4, scoped, tag = 'scoped memory for linmodel_forward.1']
    #allocation5 [shape = 's32[1]{0}', space=sflag, size = 0x4, scoped, tag = 'scoped memory for linmodel_forward.1']
    #allocation6 [shape = 'u8[1024]{0}', space=vmem, size = 0x400, scoped, tag = 'output window, operand 0, single buffered']
    %10 = vsyncpa [#allocation4], 0
    %11 = vsyncpa [#allocation5], 0
    // Predicated region
    $region2: #{linmodel_forward.1} parent=1 // pred_check
      _
    $region3: #{linmodel_forward.1} parent=1 // pred_check_branch
      %13 = sbr.rel (0) target = $region5
    $region4: #{linmodel_forward.1} parent=1 // pred_region
      _
    $region5: #{linmodel_forward.1} parent=1 // pred_fallthru
      _
    // Predicated region
    $region6: #{linmodel_forward.1} parent=1 // pred_check
      _
    $region7: #{linmodel_forward.1} parent=1 // pred_check_branch
      %15 = sbr.rel (0) target = $region9
    $region8: #{linmodel_forward.1} parent=1 // pred_region
      %s17 = ssub.s32 8192, 8192
      %18 = vsyncadd [#allocation4], %s17
      %s19 = sshll.u32 [#allocation3], 4
      %s20 = int_to_ptr.vmem [resolvable:$true] %s19
      %25 = dma.hbm_to_vmem [thread:$0]  %s1, 8192, %s20, [#allocation4], 64, 64, 4
    $region9: #{linmodel_forward.1} parent=1 // pred_fallthru
      _
    // Predicated region
    $region10: #{linmodel_forward.1} parent=1 // pred_check
      _
    $region11: #{linmodel_forward.1} parent=1 // pred_check_branch
      %27 = sbr.rel (0) target = $region13
    $region12: #{linmodel_forward.1} parent=1 // pred_region
      _
    $region13: #{linmodel_forward.1} parent=1 // pred_fallthru
      _
    // Predicated region
    $region14: #{linmodel_forward.1} parent=1 // pred_check
      _
    $region15: #{linmodel_forward.1} parent=1 // pred_check_branch
      %29 = sbr.rel (0) target = $region17
    $region16: #{linmodel_forward.1} parent=1 // pred_region
      _
    $region17: #{linmodel_forward.1} parent=1 // pred_fallthru
      _
    // Predicated region
    $region18: #{linmodel_forward.1} parent=1 // pred_check
      _
    $region19: #{linmodel_forward.1} parent=1 // pred_check_branch
      %31 = sbr.rel (0) target = $region21
    $region20: #{linmodel_forward.1} parent=1 // pred_region
      _
    $region21: #{linmodel_forward.1} parent=1 // pred_fallthru
      _
    // Predicated region
    $region22: #{linmodel_forward.1} parent=1 // pred_check
      _
    $region23: #{linmodel_forward.1} parent=1 // pred_check_branch
      %33 = sbr.rel (0) target = $region25
    $region24: #{linmodel_forward.1} parent=1 // pred_region
      %34 = dma.done [#allocation4], 8192
    $region25: #{linmodel_forward.1} parent=1 // pred_fallthru
      _
    %p36 = scmp.eq.s32.totalorder 0, 0
    // Predicated region
    $region26: #{linmodel_forward.1} parent=1 // pred_check
      %p37 = pneg %p36
    $region27: #{linmodel_forward.1} parent=1 // pred_check_branch
      %39 = sbr.rel (%p37) target = $region29
    $region28: #{linmodel_forward.1} parent=1 // pred_region
      %40 = vst [vmem:[#allocation2] sm:$0x3] 0.0
    $region29: #{linmodel_forward.1} parent=1 // pred_fallthru
      _
    %v41 = vld [vmem:[#allocation2] sm:$0x3]
    %v42 = vld [vmem:[%s0] sm:$0xff]
    %v43 = vld [vmem:[%s0 + $0x8] sm:$0xff]
    %v46 = vcombine.high %v42, %v42
    %v48 = vunpack.c.l.s4 1983009808
    %v49 = vunpack.c.0.s8 %v48
    %v50 = vlaneseq
    %v51 = vshrl.u32 %v50, 7
    %v52 = vsub.s32 %v49, %v51
    %v53 = vrot.slane %v42, %v52
    %v55 = vunpack.c.l.s4 1983009808
    %v56 = vunpack.c.0.s8 %v55
    %v57 = vlaneseq
    %v58 = vshrl.u32 %v57, 7
    %v59 = vsub.s32 %v56, %v58
    %v60 = vrot.slane %v46, %v59
    %v61 = vcombine.high %v53, %v53
    %v62 = vcombine.high %v60, %v60
    %v63 = vcombine.high %v43, %v43
    %v65 = vunpack.c.l.s4 1983009808
    %v66 = vunpack.c.0.s8 %v65
    %v67 = vlaneseq
    %v68 = vshrl.u32 %v67, 7
    %v69 = vsub.s32 %v66, %v68
    %v70 = vrot.slane %v43, %v69
    %v72 = vunpack.c.l.s4 1983009808
    %v73 = vunpack.c.0.s8 %v72
    %v74 = vlaneseq
    %v75 = vshrl.u32 %v74, 7
    %v76 = vsub.s32 %v73, %v75
    %v77 = vrot.slane %v63, %v76
    %v78 = vcombine.high %v70, %v70
    %v79 = vcombine.high %v77, %v77
    %v88 = vpack.c.bf16 %v53, %v53
    %v89 = vpack.c.bf16 %v61, %v61
    %v90 = vpack.c.bf16 %v60, %v60
    %v91 = vpack.c.bf16 %v62, %v62
    %v92 = vpack.c.bf16 %v70, %v70
    %v93 = vpack.c.bf16 %v78, %v78
    %v94 = vpack.c.bf16 %v77, %v77
    %v95 = vpack.c.bf16 %v79, %v79
    %v96 = vld [vmem:[#allocation3] sm:$0xf]
    %v97 = vld [vmem:[#allocation3 + $0x4] sm:$0xf]
    %v98 = vld [vmem:[#allocation3 + $0x8] sm:$0xf]
    %v99 = vld [vmem:[#allocation3 + $0xc] sm:$0xf]
    %v100 = vld [vmem:[#allocation3 + $0x10] sm:$0xf]
    %v101 = vld [vmem:[#allocation3 + $0x14] sm:$0xf]
    %v102 = vld [vmem:[#allocation3 + $0x18] sm:$0xf]
    %v103 = vld [vmem:[#allocation3 + $0x1c] sm:$0xf]
    %v104 = vld [vmem:[#allocation3 + $0x20] sm:$0xf]
    %v105 = vld [vmem:[#allocation3 + $0x24] sm:$0xf]
    %v106 = vld [vmem:[#allocation3 + $0x28] sm:$0xf]
    %v107 = vld [vmem:[#allocation3 + $0x2c] sm:$0xf]
    %v108 = vld [vmem:[#allocation3 + $0x30] sm:$0xf]
    %v109 = vld [vmem:[#allocation3 + $0x34] sm:$0xf]
    %v110 = vld [vmem:[#allocation3 + $0x38] sm:$0xf]
    %v111 = vld [vmem:[#allocation3 + $0x3c] sm:$0xf]
    %v112 = vld [vmem:[#allocation3 + $0x40] sm:$0xf]
    %v113 = vld [vmem:[#allocation3 + $0x44] sm:$0xf]
    %v114 = vld [vmem:[#allocation3 + $0x48] sm:$0xf]
    %v115 = vld [vmem:[#allocation3 + $0x4c] sm:$0xf]
    %v116 = vld [vmem:[#allocation3 + $0x50] sm:$0xf]
    %v117 = vld [vmem:[#allocation3 + $0x54] sm:$0xf]
    %v118 = vld [vmem:[#allocation3 + $0x58] sm:$0xf]
    %v119 = vld [vmem:[#allocation3 + $0x5c] sm:$0xf]
    %v120 = vld [vmem:[#allocation3 + $0x60] sm:$0xf]
    %v121 = vld [vmem:[#allocation3 + $0x64] sm:$0xf]
    %v122 = vld [vmem:[#allocation3 + $0x68] sm:$0xf]
    %v123 = vld [vmem:[#allocation3 + $0x6c] sm:$0xf]
    %v124 = vld [vmem:[#allocation3 + $0x70] sm:$0xf]
    %v125 = vld [vmem:[#allocation3 + $0x74] sm:$0xf]
    %v126 = vld [vmem:[#allocation3 + $0x78] sm:$0xf]
    %v127 = vld [vmem:[#allocation3 + $0x7c] sm:$0xf]
    %v128 = vld [vmem:[#allocation3 + $0x80] sm:$0xf]
    %v129 = vld [vmem:[#allocation3 + $0x84] sm:$0xf]
    %v130 = vld [vmem:[#allocation3 + $0x88] sm:$0xf]
    %v131 = vld [vmem:[#allocation3 + $0x8c] sm:$0xf]
    %v132 = vld [vmem:[#allocation3 + $0x90] sm:$0xf]
    %v133 = vld [vmem:[#allocation3 + $0x94] sm:$0xf]
    %v134 = vld [vmem:[#allocation3 + $0x98] sm:$0xf]
    %v135 = vld [vmem:[#allocation3 + $0x9c] sm:$0xf]
    %v136 = vld [vmem:[#allocation3 + $0xa0] sm:$0xf]
    %v137 = vld [vmem:[#allocation3 + $0xa4] sm:$0xf]
    %v138 = vld [vmem:[#allocation3 + $0xa8] sm:$0xf]
    %v139 = vld [vmem:[#allocation3 + $0xac] sm:$0xf]
    %v140 = vld [vmem:[#allocation3 + $0xb0] sm:$0xf]
    %v141 = vld [vmem:[#allocation3 + $0xb4] sm:$0xf]
    %v142 = vld [vmem:[#allocation3 + $0xb8] sm:$0xf]
    %v143 = vld [vmem:[#allocation3 + $0xbc] sm:$0xf]
    %v144 = vld [vmem:[#allocation3 + $0xc0] sm:$0xf]
    %v145 = vld [vmem:[#allocation3 + $0xc4] sm:$0xf]
    %v146 = vld [vmem:[#allocation3 + $0xc8] sm:$0xf]
    %v147 = vld [vmem:[#allocation3 + $0xcc] sm:$0xf]
    %v148 = vld [vmem:[#allocation3 + $0xd0] sm:$0xf]
    %v149 = vld [vmem:[#allocation3 + $0xd4] sm:$0xf]
    %v150 = vld [vmem:[#allocation3 + $0xd8] sm:$0xf]
    %v151 = vld [vmem:[#allocation3 + $0xdc] sm:$0xf]
    %v152 = vld [vmem:[#allocation3 + $0xe0] sm:$0xf]
    %v153 = vld [vmem:[#allocation3 + $0xe4] sm:$0xf]
    %v154 = vld [vmem:[#allocation3 + $0xe8] sm:$0xf]
    %v155 = vld [vmem:[#allocation3 + $0xec] sm:$0xf]
    %v156 = vld [vmem:[#allocation3 + $0xf0] sm:$0xf]
    %v157 = vld [vmem:[#allocation3 + $0xf4] sm:$0xf]
    %v158 = vld [vmem:[#allocation3 + $0xf8] sm:$0xf]
    %v159 = vld [vmem:[#allocation3 + $0xfc] sm:$0xf]
    %v160 = vld [vmem:[#allocation3 + $0x100] sm:$0xf]
    %v161 = vld [vmem:[#allocation3 + $0x104] sm:$0xf]
    %v162 = vld [vmem:[#allocation3 + $0x108] sm:$0xf]
    %v163 = vld [vmem:[#allocation3 + $0x10c] sm:$0xf]
    %v164 = vld [vmem:[#allocation3 + $0x110] sm:$0xf]
    %v165 = vld [vmem:[#allocation3 + $0x114] sm:$0xf]
    %v166 = vld [vmem:[#allocation3 + $0x118] sm:$0xf]
    %v167 = vld [vmem:[#allocation3 + $0x11c] sm:$0xf]
    %v168 = vld [vmem:[#allocation3 + $0x120] sm:$0xf]
    %v169 = vld [vmem:[#allocation3 + $0x124] sm:$0xf]
    %v170 = vld [vmem:[#allocation3 + $0x128] sm:$0xf]
    %v171 = vld [vmem:[#allocation3 + $0x12c] sm:$0xf]
    %v172 = vld [vmem:[#allocation3 + $0x130] sm:$0xf]
    %v173 = vld [vmem:[#allocation3 + $0x134] sm:$0xf]
    %v174 = vld [vmem:[#allocation3 + $0x138] sm:$0xf]
    %v175 = vld [vmem:[#allocation3 + $0x13c] sm:$0xf]
    %v176 = vld [vmem:[#allocation3 + $0x140] sm:$0xf]
    %v177 = vld [vmem:[#allocation3 + $0x144] sm:$0xf]
    %v178 = vld [vmem:[#allocation3 + $0x148] sm:$0xf]
    %v179 = vld [vmem:[#allocation3 + $0x14c] sm:$0xf]
    %v180 = vld [vmem:[#allocation3 + $0x150] sm:$0xf]
    %v181 = vld [vmem:[#allocation3 + $0x154] sm:$0xf]
    %v182 = vld [vmem:[#allocation3 + $0x158] sm:$0xf]
    %v183 = vld [vmem:[#allocation3 + $0x15c] sm:$0xf]
    %v184 = vld [vmem:[#allocation3 + $0x160] sm:$0xf]
    %v185 = vld [vmem:[#allocation3 + $0x164] sm:$0xf]
    %v186 = vld [vmem:[#allocation3 + $0x168] sm:$0xf]
    %v187 = vld [vmem:[#allocation3 + $0x16c] sm:$0xf]
    %v188 = vld [vmem:[#allocation3 + $0x170] sm:$0xf]
    %v189 = vld [vmem:[#allocation3 + $0x174] sm:$0xf]
    %v190 = vld [vmem:[#allocation3 + $0x178] sm:$0xf]
    %v191 = vld [vmem:[#allocation3 + $0x17c] sm:$0xf]
    %v192 = vld [vmem:[#allocation3 + $0x180] sm:$0xf]
    %v193 = vld [vmem:[#allocation3 + $0x184] sm:$0xf]
    %v194 = vld [vmem:[#allocation3 + $0x188] sm:$0xf]
    %v195 = vld [vmem:[#allocation3 + $0x18c] sm:$0xf]
    %v196 = vld [vmem:[#allocation3 + $0x190] sm:$0xf]
    %v197 = vld [vmem:[#allocation3 + $0x194] sm:$0xf]
    %v198 = vld [vmem:[#allocation3 + $0x198] sm:$0xf]
    %v199 = vld [vmem:[#allocation3 + $0x19c] sm:$0xf]
    %v200 = vld [vmem:[#allocation3 + $0x1a0] sm:$0xf]
    %v201 = vld [vmem:[#allocation3 + $0x1a4] sm:$0xf]
    %v202 = vld [vmem:[#allocation3 + $0x1a8] sm:$0xf]
    %v203 = vld [vmem:[#allocation3 + $0x1ac] sm:$0xf]
    %v204 = vld [vmem:[#allocation3 + $0x1b0] sm:$0xf]
    %v205 = vld [vmem:[#allocation3 + $0x1b4] sm:$0xf]
    %v206 = vld [vmem:[#allocation3 + $0x1b8] sm:$0xf]
    %v207 = vld [vmem:[#allocation3 + $0x1bc] sm:$0xf]
    %v208 = vld [vmem:[#allocation3 + $0x1c0] sm:$0xf]
    %v209 = vld [vmem:[#allocation3 + $0x1c4] sm:$0xf]
    %v210 = vld [vmem:[#allocation3 + $0x1c8] sm:$0xf]
    %v211 = vld [vmem:[#allocation3 + $0x1cc] sm:$0xf]
    %v212 = vld [vmem:[#allocation3 + $0x1d0] sm:$0xf]
    %v213 = vld [vmem:[#allocation3 + $0x1d4] sm:$0xf]
    %v214 = vld [vmem:[#allocation3 + $0x1d8] sm:$0xf]
    %v215 = vld [vmem:[#allocation3 + $0x1dc] sm:$0xf]
    %v216 = vld [vmem:[#allocation3 + $0x1e0] sm:$0xf]
    %v217 = vld [vmem:[#allocation3 + $0x1e4] sm:$0xf]
    %v218 = vld [vmem:[#allocation3 + $0x1e8] sm:$0xf]
    %v219 = vld [vmem:[#allocation3 + $0x1ec] sm:$0xf]
    %v220 = vld [vmem:[#allocation3 + $0x1f0] sm:$0xf]
    %v221 = vld [vmem:[#allocation3 + $0x1f4] sm:$0xf]
    %v222 = vld [vmem:[#allocation3 + $0x1f8] sm:$0xf]
    %v223 = vld [vmem:[#allocation3 + $0x1fc] sm:$0xf]
    %v352 = vunpack.c.l.b16 %v96
    %v353 = vunpack.c.l.b16 %v97
    %v354 = vunpack.c.l.b16 %v98
    %v355 = vunpack.c.l.b16 %v99
    %v356 = vunpack.c.l.b16 %v100
    %v357 = vunpack.c.l.b16 %v101
    %v358 = vunpack.c.l.b16 %v102
    %v359 = vunpack.c.l.b16 %v103
    %v360 = vunpack.c.l.b16 %v104
    %v361 = vunpack.c.l.b16 %v105
    %v362 = vunpack.c.l.b16 %v106
    %v363 = vunpack.c.l.b16 %v107
    %v364 = vunpack.c.l.b16 %v108
    %v365 = vunpack.c.l.b16 %v109
    %v366 = vunpack.c.l.b16 %v110
    %v367 = vunpack.c.l.b16 %v111
    %v368 = vunpack.c.l.b16 %v112
    %v369 = vunpack.c.l.b16 %v113
    %v370 = vunpack.c.l.b16 %v114
    %v371 = vunpack.c.l.b16 %v115
    %v372 = vunpack.c.l.b16 %v116
    %v373 = vunpack.c.l.b16 %v117
    %v374 = vunpack.c.l.b16 %v118
    %v375 = vunpack.c.l.b16 %v119
    %v376 = vunpack.c.l.b16 %v120
    %v377 = vunpack.c.l.b16 %v121
    %v378 = vunpack.c.l.b16 %v122
    %v379 = vunpack.c.l.b16 %v123
    %v380 = vunpack.c.l.b16 %v124
    %v381 = vunpack.c.l.b16 %v125
    %v382 = vunpack.c.l.b16 %v126
    %v383 = vunpack.c.l.b16 %v127
    %v384 = vunpack.c.l.b16 %v128
    %v385 = vunpack.c.l.b16 %v129
    %v386 = vunpack.c.l.b16 %v130
    %v387 = vunpack.c.l.b16 %v131
    %v388 = vunpack.c.l.b16 %v132
    %v389 = vunpack.c.l.b16 %v133
    %v390 = vunpack.c.l.b16 %v134
    %v391 = vunpack.c.l.b16 %v135
    %v392 = vunpack.c.l.b16 %v136
    %v393 = vunpack.c.l.b16 %v137
    %v394 = vunpack.c.l.b16 %v138
    %v395 = vunpack.c.l.b16 %v139
    %v396 = vunpack.c.l.b16 %v140
    %v397 = vunpack.c.l.b16 %v141
    %v398 = vunpack.c.l.b16 %v142
    %v399 = vunpack.c.l.b16 %v143
    %v400 = vunpack.c.l.b16 %v144
    %v401 = vunpack.c.l.b16 %v145
    %v402 = vunpack.c.l.b16 %v146
    %v403 = vunpack.c.l.b16 %v147
    %v404 = vunpack.c.l.b16 %v148
    %v405 = vunpack.c.l.b16 %v149
    %v406 = vunpack.c.l.b16 %v150
    %v407 = vunpack.c.l.b16 %v151
    %v408 = vunpack.c.l.b16 %v152
    %v409 = vunpack.c.l.b16 %v153
    %v410 = vunpack.c.l.b16 %v154
    %v411 = vunpack.c.l.b16 %v155
    %v412 = vunpack.c.l.b16 %v156
    %v413 = vunpack.c.l.b16 %v157
    %v414 = vunpack.c.l.b16 %v158
    %v415 = vunpack.c.l.b16 %v159
    %v416 = vunpack.c.l.b16 %v160
    %v417 = vunpack.c.l.b16 %v161
    %v418 = vunpack.c.l.b16 %v162
    %v419 = vunpack.c.l.b16 %v163
    %v420 = vunpack.c.l.b16 %v164
    %v421 = vunpack.c.l.b16 %v165
    %v422 = vunpack.c.l.b16 %v166
    %v423 = vunpack.c.l.b16 %v167
    %v424 = vunpack.c.l.b16 %v168
    %v425 = vunpack.c.l.b16 %v169
    %v426 = vunpack.c.l.b16 %v170
    %v427 = vunpack.c.l.b16 %v171
    %v428 = vunpack.c.l.b16 %v172
    %v429 = vunpack.c.l.b16 %v173
    %v430 = vunpack.c.l.b16 %v174
    %v431 = vunpack.c.l.b16 %v175
    %v432 = vunpack.c.l.b16 %v176
    %v433 = vunpack.c.l.b16 %v177
    %v434 = vunpack.c.l.b16 %v178
    %v435 = vunpack.c.l.b16 %v179
    %v436 = vunpack.c.l.b16 %v180
    %v437 = vunpack.c.l.b16 %v181
    %v438 = vunpack.c.l.b16 %v182
    %v439 = vunpack.c.l.b16 %v183
    %v440 = vunpack.c.l.b16 %v184
    %v441 = vunpack.c.l.b16 %v185
    %v442 = vunpack.c.l.b16 %v186
    %v443 = vunpack.c.l.b16 %v187
    %v444 = vunpack.c.l.b16 %v188
    %v445 = vunpack.c.l.b16 %v189
    %v446 = vunpack.c.l.b16 %v190
    %v447 = vunpack.c.l.b16 %v191
    %v448 = vunpack.c.l.b16 %v192
    %v449 = vunpack.c.l.b16 %v193
    %v450 = vunpack.c.l.b16 %v194
    %v451 = vunpack.c.l.b16 %v195
    %v452 = vunpack.c.l.b16 %v196
    %v453 = vunpack.c.l.b16 %v197
    %v454 = vunpack.c.l.b16 %v198
    %v455 = vunpack.c.l.b16 %v199
    %v456 = vunpack.c.l.b16 %v200
    %v457 = vunpack.c.l.b16 %v201
    %v458 = vunpack.c.l.b16 %v202
    %v459 = vunpack.c.l.b16 %v203
    %v460 = vunpack.c.l.b16 %v204
    %v461 = vunpack.c.l.b16 %v205
    %v462 = vunpack.c.l.b16 %v206
    %v463 = vunpack.c.l.b16 %v207
    %v464 = vunpack.c.l.b16 %v208
    %v465 = vunpack.c.l.b16 %v209
    %v466 = vunpack.c.l.b16 %v210
    %v467 = vunpack.c.l.b16 %v211
    %v468 = vunpack.c.l.b16 %v212
    %v469 = vunpack.c.l.b16 %v213
    %v470 = vunpack.c.l.b16 %v214
    %v471 = vunpack.c.l.b16 %v215
    %v472 = vunpack.c.l.b16 %v216
    %v473 = vunpack.c.l.b16 %v217
    %v474 = vunpack.c.l.b16 %v218
    %v475 = vunpack.c.l.b16 %v219
    %v476 = vunpack.c.l.b16 %v220
    %v477 = vunpack.c.l.b16 %v221
    %v478 = vunpack.c.l.b16 %v222
    %v479 = vunpack.c.l.b16 %v223
    %v480 = vpack.c.b16 %v353, %v352
    %v481 = vpack.c.b16 %v355, %v354
    %v482 = vpack.c.b16 %v357, %v356
    %v483 = vpack.c.b16 %v359, %v358
    %v484 = vpack.c.b16 %v361, %v360
    %v485 = vpack.c.b16 %v363, %v362
    %v486 = vpack.c.b16 %v365, %v364
    %v487 = vpack.c.b16 %v367, %v366
    %v488 = vpack.c.b16 %v369, %v368
    %v489 = vpack.c.b16 %v371, %v370
    %v490 = vpack.c.b16 %v373, %v372
    %v491 = vpack.c.b16 %v375, %v374
    %v492 = vpack.c.b16 %v377, %v376
    %v493 = vpack.c.b16 %v379, %v378
    %v494 = vpack.c.b16 %v381, %v380
    %v495 = vpack.c.b16 %v383, %v382
    %v496 = vpack.c.b16 %v385, %v384
    %v497 = vpack.c.b16 %v387, %v386
    %v498 = vpack.c.b16 %v389, %v388
    %v499 = vpack.c.b16 %v391, %v390
    %v500 = vpack.c.b16 %v393, %v392
    %v501 = vpack.c.b16 %v395, %v394
    %v502 = vpack.c.b16 %v397, %v396
    %v503 = vpack.c.b16 %v399, %v398
    %v504 = vpack.c.b16 %v401, %v400
    %v505 = vpack.c.b16 %v403, %v402
    %v506 = vpack.c.b16 %v405, %v404
    %v507 = vpack.c.b16 %v407, %v406
    %v508 = vpack.c.b16 %v409, %v408
    %v509 = vpack.c.b16 %v411, %v410
    %v510 = vpack.c.b16 %v413, %v412
    %v511 = vpack.c.b16 %v415, %v414
    %v512 = vpack.c.b16 %v417, %v416
    %v513 = vpack.c.b16 %v419, %v418
    %v514 = vpack.c.b16 %v421, %v420
    %v515 = vpack.c.b16 %v423, %v422
    %v516 = vpack.c.b16 %v425, %v424
    %v517 = vpack.c.b16 %v427, %v426
    %v518 = vpack.c.b16 %v429, %v428
    %v519 = vpack.c.b16 %v431, %v430
    %v520 = vpack.c.b16 %v433, %v432
    %v521 = vpack.c.b16 %v435, %v434
    %v522 = vpack.c.b16 %v437, %v436
    %v523 = vpack.c.b16 %v439, %v438
    %v524 = vpack.c.b16 %v441, %v440
    %v525 = vpack.c.b16 %v443, %v442
    %v526 = vpack.c.b16 %v445, %v444
    %v527 = vpack.c.b16 %v447, %v446
    %v528 = vpack.c.b16 %v449, %v448
    %v529 = vpack.c.b16 %v451, %v450
    %v530 = vpack.c.b16 %v453, %v452
    %v531 = vpack.c.b16 %v455, %v454
    %v532 = vpack.c.b16 %v457, %v456
    %v533 = vpack.c.b16 %v459, %v458
    %v534 = vpack.c.b16 %v461, %v460
    %v535 = vpack.c.b16 %v463, %v462
    %v536 = vpack.c.b16 %v465, %v464
    %v537 = vpack.c.b16 %v467, %v466
    %v538 = vpack.c.b16 %v469, %v468
    %v539 = vpack.c.b16 %v471, %v470
    %v540 = vpack.c.b16 %v473, %v472
    %v541 = vpack.c.b16 %v475, %v474
    %v542 = vpack.c.b16 %v477, %v476
    %v543 = vpack.c.b16 %v479, %v478
    %608 = vmatprep.subr.bf16.mxu0 0
    %609 = vmatpush1.bf16.msra.mxu0 %v480
    %610 = vmatprep.subr.bf16.mxu0 0
    %611 = vmatpush1.bf16.msra.mxu0 %v481
    %612 = vmatprep.subr.bf16.mxu0 0
    %613 = vmatpush1.bf16.msra.mxu0 %v482
    %614 = vmatprep.subr.bf16.mxu0 0
    %615 = vmatpush1.bf16.msra.mxu0 %v483
    %616 = vmatprep.subr.bf16.mxu0 0
    %617 = vmatpush1.bf16.msra.mxu0 %v484
    %618 = vmatprep.subr.bf16.mxu0 0
    %619 = vmatpush1.bf16.msra.mxu0 %v485
    %620 = vmatprep.subr.bf16.mxu0 0
    %621 = vmatpush1.bf16.msra.mxu0 %v486
    %622 = vmatprep.subr.bf16.mxu0 0
    %623 = vmatpush1.bf16.msra.mxu0 %v487
    %624 = vmatprep.subr.bf16.mxu0 0
    %625 = vmatpush1.bf16.msra.mxu0 %v488
    %626 = vmatprep.subr.bf16.mxu0 0
    %627 = vmatpush1.bf16.msra.mxu0 %v489
    %628 = vmatprep.subr.bf16.mxu0 0
    %629 = vmatpush1.bf16.msra.mxu0 %v490
    %630 = vmatprep.subr.bf16.mxu0 0
    %631 = vmatpush1.bf16.msra.mxu0 %v491
    %632 = vmatprep.subr.bf16.mxu0 0
    %633 = vmatpush1.bf16.msra.mxu0 %v492
    %634 = vmatprep.subr.bf16.mxu0 0
    %635 = vmatpush1.bf16.msra.mxu0 %v493
    %636 = vmatprep.subr.bf16.mxu0 0
    %637 = vmatpush1.bf16.msra.mxu0 %v494
    %638 = vmatprep.subr.bf16.mxu0 0
    %639 = vmatpush1.bf16.msra.mxu0 %v495
    %640 = vmatprep.mubr.bf16.mxu0 %v89
    %641 = vmatmul.mubr.bf16.gmra.mrb[0].mxu0 %v88
    %v642 = vpop.f32.mrb[0].mxu0
    %v643 = vadd.f32 0.0, %v642
    %v644 = vpop.f32.mrb[0].mxu0
    %v645 = vpop.f32.mrb[0].mxu0
    %v646 = vpop.f32.mrb[0].mxu0
    %647 = vdwg.mxu0
    %648 = vmatprep.subr.bf16.mxu0 0
    %649 = vmatpush1.bf16.msra.mxu0 %v496
    %650 = vmatprep.subr.bf16.mxu0 0
    %651 = vmatpush1.bf16.msra.mxu0 %v497
    %652 = vmatprep.subr.bf16.mxu0 0
    %653 = vmatpush1.bf16.msra.mxu0 %v498
    %654 = vmatprep.subr.bf16.mxu0 0
    %655 = vmatpush1.bf16.msra.mxu0 %v499
    %656 = vmatprep.subr.bf16.mxu0 0
    %657 = vmatpush1.bf16.msra.mxu0 %v500
    %658 = vmatprep.subr.bf16.mxu0 0
    %659 = vmatpush1.bf16.msra.mxu0 %v501
    %660 = vmatprep.subr.bf16.mxu0 0
    %661 = vmatpush1.bf16.msra.mxu0 %v502
    %662 = vmatprep.subr.bf16.mxu0 0
    %663 = vmatpush1.bf16.msra.mxu0 %v503
    %664 = vmatprep.subr.bf16.mxu0 0
    %665 = vmatpush1.bf16.msra.mxu0 %v504
    %666 = vmatprep.subr.bf16.mxu0 0
    %667 = vmatpush1.bf16.msra.mxu0 %v505
    %668 = vmatprep.subr.bf16.mxu0 0
    %669 = vmatpush1.bf16.msra.mxu0 %v506
    %670 = vmatprep.subr.bf16.mxu0 0
    %671 = vmatpush1.bf16.msra.mxu0 %v507
    %672 = vmatprep.subr.bf16.mxu0 0
    %673 = vmatpush1.bf16.msra.mxu0 %v508
    %674 = vmatprep.subr.bf16.mxu0 0
    %675 = vmatpush1.bf16.msra.mxu0 %v509
    %676 = vmatprep.subr.bf16.mxu0 0
    %677 = vmatpush1.bf16.msra.mxu0 %v510
    %678 = vmatprep.subr.bf16.mxu0 0
    %679 = vmatpush1.bf16.msra.mxu0 %v511
    %680 = vmatprep.mubr.bf16.mxu0 %v91
    %681 = vmatmul.mubr.bf16.gmra.mrb[0].mxu0 %v90
    %v682 = vpop.f32.mrb[0].mxu0
    %v683 = vadd.f32 %v643, %v682
    %v684 = vpop.f32.mrb[0].mxu0
    %v685 = vpop.f32.mrb[0].mxu0
    %v686 = vpop.f32.mrb[0].mxu0
    %687 = vdwg.mxu0
    %688 = vmatprep.subr.bf16.mxu0 0
    %689 = vmatpush1.bf16.msra.mxu0 %v512
    %690 = vmatprep.subr.bf16.mxu0 0
    %691 = vmatpush1.bf16.msra.mxu0 %v513
    %692 = vmatprep.subr.bf16.mxu0 0
    %693 = vmatpush1.bf16.msra.mxu0 %v514
    %694 = vmatprep.subr.bf16.mxu0 0
    %695 = vmatpush1.bf16.msra.mxu0 %v515
    %696 = vmatprep.subr.bf16.mxu0 0
    %697 = vmatpush1.bf16.msra.mxu0 %v516
    %698 = vmatprep.subr.bf16.mxu0 0
    %699 = vmatpush1.bf16.msra.mxu0 %v517
    %700 = vmatprep.subr.bf16.mxu0 0
    %701 = vmatpush1.bf16.msra.mxu0 %v518
    %702 = vmatprep.subr.bf16.mxu0 0
    %703 = vmatpush1.bf16.msra.mxu0 %v519
    %704 = vmatprep.subr.bf16.mxu0 0
    %705 = vmatpush1.bf16.msra.mxu0 %v520
    %706 = vmatprep.subr.bf16.mxu0 0
    %707 = vmatpush1.bf16.msra.mxu0 %v521
    %708 = vmatprep.subr.bf16.mxu0 0
    %709 = vmatpush1.bf16.msra.mxu0 %v522
    %710 = vmatprep.subr.bf16.mxu0 0
    %711 = vmatpush1.bf16.msra.mxu0 %v523
    %712 = vmatprep.subr.bf16.mxu0 0
    %713 = vmatpush1.bf16.msra.mxu0 %v524
    %714 = vmatprep.subr.bf16.mxu0 0
    %715 = vmatpush1.bf16.msra.mxu0 %v525
    %716 = vmatprep.subr.bf16.mxu0 0
    %717 = vmatpush1.bf16.msra.mxu0 %v526
    %718 = vmatprep.subr.bf16.mxu0 0
    %719 = vmatpush1.bf16.msra.mxu0 %v527
    %720 = vmatprep.mubr.bf16.mxu0 %v93
    %721 = vmatmul.mubr.bf16.gmra.mrb[0].mxu0 %v92
    %v722 = vpop.f32.mrb[0].mxu0
    %v723 = vadd.f32 %v683, %v722
    %v724 = vpop.f32.mrb[0].mxu0
    %v725 = vpop.f32.mrb[0].mxu0
    %v726 = vpop.f32.mrb[0].mxu0
    %727 = vdwg.mxu0
    %728 = vmatprep.subr.bf16.mxu0 0
    %729 = vmatpush1.bf16.msra.mxu0 %v528
    %730 = vmatprep.subr.bf16.mxu0 0
    %731 = vmatpush1.bf16.msra.mxu0 %v529
    %732 = vmatprep.subr.bf16.mxu0 0
    %733 = vmatpush1.bf16.msra.mxu0 %v530
    %734 = vmatprep.subr.bf16.mxu0 0
    %735 = vmatpush1.bf16.msra.mxu0 %v531
    %736 = vmatprep.subr.bf16.mxu0 0
    %737 = vmatpush1.bf16.msra.mxu0 %v532
    %738 = vmatprep.subr.bf16.mxu0 0
    %739 = vmatpush1.bf16.msra.mxu0 %v533
    %740 = vmatprep.subr.bf16.mxu0 0
    %741 = vmatpush1.bf16.msra.mxu0 %v534
    %742 = vmatprep.subr.bf16.mxu0 0
    %743 = vmatpush1.bf16.msra.mxu0 %v535
    %744 = vmatprep.subr.bf16.mxu0 0
    %745 = vmatpush1.bf16.msra.mxu0 %v536
    %746 = vmatprep.subr.bf16.mxu0 0
    %747 = vmatpush1.bf16.msra.mxu0 %v537
    %748 = vmatprep.subr.bf16.mxu0 0
    %749 = vmatpush1.bf16.msra.mxu0 %v538
    %750 = vmatprep.subr.bf16.mxu0 0
    %751 = vmatpush1.bf16.msra.mxu0 %v539
    %752 = vmatprep.subr.bf16.mxu0 0
    %753 = vmatpush1.bf16.msra.mxu0 %v540
    %754 = vmatprep.subr.bf16.mxu0 0
    %755 = vmatpush1.bf16.msra.mxu0 %v541
    %756 = vmatprep.subr.bf16.mxu0 0
    %757 = vmatpush1.bf16.msra.mxu0 %v542
    %758 = vmatprep.subr.bf16.mxu0 0
    %759 = vmatpush1.bf16.msra.mxu0 %v543
    %760 = vmatprep.mubr.bf16.mxu0 %v95
    %761 = vmatmul.mubr.bf16.gmra.mrb[0].mxu0 %v94
    %v762 = vpop.f32.mrb[0].mxu0
    %v763 = vadd.f32 %v723, %v762
    %v764 = vpop.f32.mrb[0].mxu0
    %v765 = vpop.f32.mrb[0].mxu0
    %v766 = vpop.f32.mrb[0].mxu0
    %767 = vdwg.mxu0
    %v768 = vadd.f32 %v41, %v763
    %769 = vst [vmem:[#allocation2] sm:$0x3] %v768
    // Predicated region
    $region30: #{linmodel_forward.1} parent=1 // pred_check
      %p770 = pneg %p36
    $region31: #{linmodel_forward.1} parent=1 // pred_check_branch
      %772 = sbr.rel (%p770) target = $region33
    $region32: #{linmodel_forward.1} parent=1 // pred_region
      %v773 = vld [vmem:[#allocation2] sm:$0x3]
      %v774 = vld [vmem:[%s2] sm:$0x1]
      %v776 = vlaneseq
      %v777 = vshrl.u32 %v776, 7
      %v778 = vsub.s32 0, %v777
      %v779 = vrot.slane %v774, %v778
      %v781 = vadd.f32 %v773, %v779
      %v782 = vld [vmem:[%s3] sm:$0xff]
      %v783 = vld [vmem:[%s3 + $0x8] sm:$0xff]
      %v784 = vld [vmem:[%s3 + $0x10] sm:$0xff]
      %v785 = vld [vmem:[%s3 + $0x18] sm:$0xff]
      %v786 = vld [vmem:[%s3 + $0x20] sm:$0xff]
      %v787 = vld [vmem:[%s3 + $0x28] sm:$0xff]
      %v788 = vld [vmem:[%s3 + $0x30] sm:$0xff]
      %v789 = vld [vmem:[%s3 + $0x38] sm:$0xff]
      %v790 = vld [vmem:[%s3 + $0x40] sm:$0xff]
      %v791 = vld [vmem:[%s3 + $0x48] sm:$0xff]
      %v792 = vld [vmem:[%s3 + $0x50] sm:$0xff]
      %v793 = vld [vmem:[%s3 + $0x58] sm:$0xff]
      %v794 = vld [vmem:[%s3 + $0x60] sm:$0xff]
      %v795 = vld [vmem:[%s3 + $0x68] sm:$0xff]
      %v796 = vld [vmem:[%s3 + $0x70] sm:$0xff]
      %v797 = vld [vmem:[%s3 + $0x78] sm:$0xff]
      %v798 = vld [vmem:[%s4] sm:$0x1]
      %v800 = vlaneseq
      %v801 = vshrl.u32 %v800, 7
      %v802 = vsub.s32 0, %v801
      %v803 = vrot.slane %v798, %v802
      %805 = vmatprep.subr.mxu0 0.0
      %806 = vmatpush1.msra.mxu0 %v782
      %807 = vmatprep.subr.mxu0 0.0
      %808 = vmatpush1.msra.mxu0 %v783
      %809 = vmatprep.subr.mxu0 0.0
      %810 = vmatpush1.msra.mxu0 %v784
      %811 = vmatprep.subr.mxu0 0.0
      %812 = vmatpush1.msra.mxu0 %v785
      %813 = vmatprep.subr.mxu0 0.0
      %814 = vmatpush1.msra.mxu0 %v786
      %815 = vmatprep.subr.mxu0 0.0
      %816 = vmatpush1.msra.mxu0 %v787
      %817 = vmatprep.subr.mxu0 0.0
      %818 = vmatpush1.msra.mxu0 %v788
      %819 = vmatprep.subr.mxu0 0.0
      %820 = vmatpush1.msra.mxu0 %v789
      %821 = vmatprep.subr.mxu0 0.0
      %822 = vmatpush1.msra.mxu0 %v790
      %823 = vmatprep.subr.mxu0 0.0
      %824 = vmatpush1.msra.mxu0 %v791
      %825 = vmatprep.subr.mxu0 0.0
      %826 = vmatpush1.msra.mxu0 %v792
      %827 = vmatprep.subr.mxu0 0.0
      %828 = vmatpush1.msra.mxu0 %v793
      %829 = vmatprep.subr.mxu0 0.0
      %830 = vmatpush1.msra.mxu0 %v794
      %831 = vmatprep.subr.mxu0 0.0
      %832 = vmatpush1.msra.mxu0 %v795
      %833 = vmatprep.subr.mxu0 0.0
      %834 = vmatpush1.msra.mxu0 %v796
      %835 = vmatprep.subr.mxu0 0.0
      %836 = vmatpush1.msra.mxu0 %v797
      %837 = vmatprep.subr.mxu0 0.0
      %838 = vmatpush1.msra.mxu0 0.0
      %839 = vmatprep.subr.mxu0 0.0
      %840 = vmatpush1.msra.mxu0 0.0
      %841 = vmatprep.subr.mxu0 0.0
      %842 = vmatpush1.msra.mxu0 0.0
      %843 = vmatprep.subr.mxu0 0.0
      %844 = vmatpush1.msra.mxu0 0.0
      %845 = vmatprep.subr.mxu0 0.0
      %846 = vmatpush1.msra.mxu0 0.0
      %847 = vmatprep.subr.mxu0 0.0
      %848 = vmatpush1.msra.mxu0 0.0
      %849 = vmatprep.subr.mxu0 0.0
      %850 = vmatpush1.msra.mxu0 0.0
      %851 = vmatprep.subr.mxu0 0.0
      %852 = vmatpush1.msra.mxu0 0.0
      %853 = vmatprep.subr.mxu0 0.0
      %854 = vmatpush1.msra.mxu0 0.0
      %855 = vmatprep.subr.mxu0 0.0
      %856 = vmatpush1.msra.mxu0 0.0
      %857 = vmatprep.subr.mxu0 0.0
      %858 = vmatpush1.msra.mxu0 0.0
      %859 = vmatprep.subr.mxu0 0.0
      %860 = vmatpush1.msra.mxu0 0.0
      %861 = vmatprep.subr.mxu0 0.0
      %862 = vmatpush1.msra.mxu0 0.0
      %863 = vmatprep.subr.mxu0 0.0
      %864 = vmatpush1.msra.mxu0 0.0
      %865 = vmatprep.subr.mxu0 0.0
      %866 = vmatpush1.msra.mxu0 0.0
      %867 = vmatprep.subr.mxu0 0.0
      %868 = vmatpush1.msra.mxu0 0.0
      %869 = vmatprep.mubr.f32.mxu0 0.0
      %870 = vmatmul.mubr.f32.gmra.mrb[0].mxu0 %v781
      %v871 = vpop.f32.mrb[0].mxu0
      %v872 = vadd.f32 %v803, %v871
      %v873 = vpop.f32.mrb[0].mxu0
      %874 = vdwg.mxu0
      %875 = vst [vmem:[#allocation6] sm:$0x3] %v872
    $region33: #{linmodel_forward.1} parent=1 // pred_fallthru
      _
    // Predicated region
    $region34: #{linmodel_forward.1} parent=1 // pred_check
      _
    $region35: #{linmodel_forward.1} parent=1 // pred_check_branch
      %877 = sbr.rel (0) target = $region37
    $region36: #{linmodel_forward.1} parent=1 // pred_region
      %s879 = ssub.s32 32, 32
      %880 = vsyncadd [#allocation5], %s879
      %s882 = sshll.u32 [#allocation6], 4
      %s883 = int_to_ptr.vmem [resolvable:$true] %s882
      %885 = dma.vmem_to_hbm [thread:$0]  %s883, 32, %s5, [#allocation5]
    $region37: #{linmodel_forward.1} parent=1 // pred_fallthru
      _
    // Predicated region
    $region38: #{linmodel_forward.1} parent=1 // pred_check
      _
    $region39: #{linmodel_forward.1} parent=1 // pred_check_branch
      %887 = sbr.rel (0) target = $region41
    $region40: #{linmodel_forward.1} parent=1 // pred_region
      %888 = dma.done [#allocation5], 32
    $region41: #{linmodel_forward.1} parent=1 // pred_fallthru
      _
    %889 = vsyncpa [#allocation4], 1
    %890 = vsyncpa [#allocation5], 1

</llo_original>
